<compile_context>
chip_gen: v7x
topology: tpu7x:2x2x1
jax: 0.10.0
libtpu: 0.0.40
codegen_flags: <defaults>
</compile_context>

<pallas_src>
import jax
import jax.numpy as jnp
from jax.experimental import pallas as pl
from jax.experimental.pallas import tpu as pltpu

IN_F = 15
HID_F = 200
OUT_F = 128

# Default batch tile: multiple of 8 (f32 sublane) and 256 (MXU height on
# v6e/v7x).  At 2048, double-buffered bf16 x/out tiles + the (TB, 200->256
# lane) f32 hidden temp are ~5-6 MiB of VMEM: safe on v5e (16 MiB scoped
# default) and leaves headroom on v6e/v7x.
DEFAULT_TB = 2048


def _round_up(n, m):
    return ((n + m - 1) // m) * m


def _choose_tiling(batch, tb):
    """Pick (TB, B_pad, n_tiles) minimizing padding, TB a multiple of 8."""
    tb_cap = max(8, (int(tb) // 8) * 8)          # force multiple of 8
    n_tiles = -(-batch // tb_cap)                # ceil
    if batch >= 16:
        # >=2 grid steps so dimension_semantics=("parallel",) can shard the
        # batch across v7x's two TensorCores; keep the grid even for balance.
        n_tiles = max(n_tiles, 2)
        if n_tiles % 2:
            n_tiles += 1
    tb_eff = _round_up(-(-batch // n_tiles), 8)  # equal-ish tiles, 8-aligned
    return tb_eff, n_tiles * tb_eff, n_tiles


def mlp_kernel(x_ref, w1_ref, b1_ref, w2_ref, b2_ref, o_ref):
    # layer1: (TB, 15) @ (15, 200) + (1, 200), ReLU   (f32 accumulate)
    h = jnp.dot(x_ref[...], w1_ref[...], preferred_element_type=jnp.float32)
    h = jnp.maximum(h + b1_ref[...], 0.0)
    # hidden act in the weight dtype (bf16 on the fast path) -> halves the
    # largest on-chip intermediate and runs the K=200 dot at bf16 MXU rate.
    h = h.astype(w2_ref.dtype)
    # layer2: (TB, 200) @ (200, 128) + (1, 128), ReLU (f32 accumulate)
    y = jnp.dot(h, w2_ref[...], preferred_element_type=jnp.float32)
    y = jnp.maximum(y + b2_ref[...], 0.0)
    o_ref[...] = y.astype(o_ref.dtype)


def mlp_feature_extractor(x, w1, b1, w2, b2, *, tb=DEFAULT_TB,
                          compute_dtype=jnp.bfloat16, out_dtype=None):
    """x: (..., 15); w1: (15, 200); b1: (200,); w2: (200, 128); b2: (128,).

    Returns (..., 128) in `out_dtype` (defaults to `compute_dtype`).
    Set compute_dtype=jnp.float32 for a bit-accurate f32 path.
    """
    if out_dtype is None:
        out_dtype = compute_dtype

    lead_shape = x.shape[:-1]
    x2d = x.reshape(-1, IN_F)
    batch = x2d.shape[0]

    tb_eff, b_pad, n_tiles = _choose_tiling(batch, tb)
    if b_pad != batch:
        x2d = jnp.pad(x2d, ((0, b_pad - batch), (0, 0)))

    x_c = x2d.astype(compute_dtype)
    w1_c = w1.astype(compute_dtype)
    w2_c = w2.astype(compute_dtype)
    # biases stay f32: negligible bytes, added to the f32 accumulators.
    b1_2d = b1.reshape(1, HID_F).astype(jnp.float32)
    b2_2d = b2.reshape(1, OUT_F).astype(jnp.float32)

    act_bytes = jnp.dtype(compute_dtype).itemsize
    out_bytes = jnp.dtype(out_dtype).itemsize
    flops = 2 * b_pad * (IN_F * HID_F + HID_F * OUT_F)
    bytes_accessed = (
        b_pad * IN_F * act_bytes            # x stream in
        + b_pad * OUT_F * out_bytes         # out stream back
        + (IN_F * HID_F + HID_F * OUT_F) * act_bytes   # w1, w2 (loaded once)
        + (HID_F + OUT_F) * 4               # b1, b2
    )

    out = pl.pallas_call(
        mlp_kernel,
        out_shape=jax.ShapeDtypeStruct((b_pad, OUT_F), out_dtype),
        grid_spec=pltpu.PrefetchScalarGridSpec(
            num_scalar_prefetch=0,
            grid=(n_tiles,),
            in_specs=[
                # x: streamed per batch tile (auto double-buffered)
                pl.BlockSpec((tb_eff, IN_F), lambda i: (i, 0)),
                # weights / biases: constant index_maps -> VMEM-resident
                pl.BlockSpec((IN_F, HID_F), lambda i: (0, 0)),
                pl.BlockSpec((1, HID_F), lambda i: (0, 0)),
                pl.BlockSpec((HID_F, OUT_F), lambda i: (0, 0)),
                pl.BlockSpec((1, OUT_F), lambda i: (0, 0)),
            ],
            out_specs=pl.BlockSpec((tb_eff, OUT_F), lambda i: (i, 0)),
        ),
        compiler_params=pltpu.CompilerParams(
            dimension_semantics=("parallel",),
        ),
        cost_estimate=pl.CostEstimate(
            flops=flops,
            transcendentals=0,
            bytes_accessed=bytes_accessed,
        ),
    )(x_c, w1_c, b1_2d, w2_c, b2_2d)

    return out[:batch].reshape(*lead_shape, OUT_F)


if __name__ == "__main__":
    key = jax.random.PRNGKey(0)
    k_x, k_w1, k_b1, k_w2, k_b2 = jax.random.split(key, 5)

    # Deterministic param init (uniform, like torch Linear), stored already
    # transposed to (in, out) for the kernel.
    bound1 = 1.0 / (IN_F ** 0.5)
    w1 = jax.random.uniform(k_w1, (IN_F, HID_F), jnp.float32, -bound1, bound1)
    b1 = jax.random.uniform(k_b1, (HID_F,), jnp.float32, -bound1, bound1)
    bound2 = 1.0 / (HID_F ** 0.5)
    w2 = jax.random.uniform(k_w2, (OUT_F * 0 + HID_F, OUT_F), jnp.float32,
                            -bound2, bound2)
    b2 = jax.random.uniform(k_b2, (OUT_F,), jnp.float32, -bound2, bound2)

    def ref_fn(xx):
        r = jnp.maximum(xx @ w1 + b1, 0.0)
        return jnp.maximum(r @ w2 + b2, 0.0)

    # 1) Pure f32 path, single small tile: bit-accurate vs the reference.
    B = 8
    x = jax.random.normal(k_x, (B, IN_F), dtype=jnp.float32)
    out_f32 = jax.block_until_ready(
        mlp_feature_extractor(x, w1, b1, w2, b2,
                              compute_dtype=jnp.float32,
                              out_dtype=jnp.float32))
    assert out_f32.shape == (B, OUT_F)
    assert jnp.allclose(out_f32, ref_fn(x), atol=1e-5, rtol=1e-5)

    # 2) Default bf16 fast path, ragged batch, non-multiple-of-8 caller tile
    #    (exercises tile clamping, even-grid split, and minimal padding).
    B2 = 37
    x2 = jax.random.normal(k_x, (B2, IN_F), dtype=jnp.float32)
    out_bf16 = jax.block_until_ready(
        mlp_feature_extractor(x2, w1, b1, w2, b2, tb=100))
    assert out_bf16.shape == (B2, OUT_F)
    assert out_bf16.dtype == jnp.bfloat16
    assert jnp.allclose(out_bf16.astype(jnp.float32), ref_fn(x2),
                        atol=5e-2, rtol=5e-2)

    # 3) bf16 compute with f32 output (downstream wants f32), multi-tile.
    B3 = 64
    x3 = jax.random.normal(k_x, (B3, IN_F), dtype=jnp.float32)
    out_mixed = jax.block_until_ready(
        mlp_feature_extractor(x3, w1, b1, w2, b2, tb=16,
                              out_dtype=jnp.float32))
    assert out_mixed.shape == (B3, OUT_F)
    assert out_mixed.dtype == jnp.float32
    assert jnp.allclose(out_mixed, ref_fn(x3), atol=5e-2, rtol=5e-2)

    print("KERNEL_OK")
</pallas_src>

<mosaic_0001>
module attributes {stable_mosaic.version = 11 : i64} {
  func.func @mlp_kernel(%arg0: i32, %arg1: memref<8x15xf32, #tpu.memory_space<vmem>>, %arg2: memref<15x200xf32, #tpu.memory_space<vmem>>, %arg3: memref<1x200xf32, #tpu.memory_space<vmem>>, %arg4: memref<200x128xf32, #tpu.memory_space<vmem>>, %arg5: memref<1x128xf32, #tpu.memory_space<vmem>>, %arg6: memref<8x128xf32, #tpu.memory_space<vmem>>) attributes {dimension_semantics = [#tpu.dimension_semantics<parallel>], iteration_bounds = array<i64: 1>, scalar_prefetch = 0 : i64, scratch_operands = 0 : i64, tpu.core_type = #tpu.core_type<tc>, window_params = [{transform_indices = @transform_0, window_bounds = array<i64: 8, 15>}, {pipeline_mode = #tpu.pipeline_mode<synchronous>, transform_indices = @transform_1, window_bounds = array<i64: 15, 200>}, {pipeline_mode = #tpu.pipeline_mode<synchronous>, transform_indices = @transform_2, window_bounds = array<i64: 1, 200>}, {pipeline_mode = #tpu.pipeline_mode<synchronous>, transform_indices = @transform_3, window_bounds = array<i64: 200, 128>}, {pipeline_mode = #tpu.pipeline_mode<synchronous>, transform_indices = @transform_4, window_bounds = array<i64: 1, 128>}, {transform_indices = @transform_5, window_bounds = array<i64: 8, 128>}]} {
    %c0 = arith.constant 0 : index
    %c0_0 = arith.constant 0 : index
    %0 = vector.load %arg1[%c0, %c0_0] : memref<8x15xf32, #tpu.memory_space<vmem>>, vector<8x15xf32>
    %c0_1 = arith.constant 0 : index
    %c0_2 = arith.constant 0 : index
    %1 = vector.load %arg2[%c0_1, %c0_2] : memref<15x200xf32, #tpu.memory_space<vmem>>, vector<15x200xf32>
    %cst = arith.constant dense<0.000000e+00> : vector<8x200xf32>
    %2 = tpu.matmul %0, %1, %cst {dimension_numbers = #tpu.dot_dimension_numbers<[1], [0], [0], [1], [0, 0, 1, 1], [], []>} : vector<8x15xf32>, vector<15x200xf32>, vector<8x200xf32> -> vector<8x200xf32>
    %c0_3 = arith.constant 0 : index
    %c0_4 = arith.constant 0 : index
    %3 = vector.load %arg3[%c0_3, %c0_4] : memref<1x200xf32, #tpu.memory_space<vmem>>, vector<1x200xf32>
    %4 = vector.broadcast %3 : vector<1x200xf32> to vector<8x200xf32>
    %5 = arith.addf %2, %4 : vector<8x200xf32>
    %cst_5 = arith.constant 0.000000e+00 : f32
    %6 = vector.broadcast %cst_5 : f32 to vector<8x200xf32>
    %7 = arith.maximumf %5, %6 : vector<8x200xf32>
    %c0_6 = arith.constant 0 : index
    %c0_7 = arith.constant 0 : index
    %8 = vector.load %arg4[%c0_6, %c0_7] : memref<200x128xf32, #tpu.memory_space<vmem>>, vector<200x128xf32>
    %cst_8 = arith.constant dense<0.000000e+00> : vector<8x128xf32>
    %9 = tpu.matmul %7, %8, %cst_8 {dimension_numbers = #tpu.dot_dimension_numbers<[1], [0], [0], [1], [0, 0, 1, 1], [], []>} : vector<8x200xf32>, vector<200x128xf32>, vector<8x128xf32> -> vector<8x128xf32>
    %c0_9 = arith.constant 0 : index
    %c0_10 = arith.constant 0 : index
    %10 = vector.load %arg5[%c0_9, %c0_10] : memref<1x128xf32, #tpu.memory_space<vmem>>, vector<1x128xf32>
    %11 = vector.broadcast %10 : vector<1x128xf32> to vector<8x128xf32>
    %12 = arith.addf %9, %11 : vector<8x128xf32>
    %cst_11 = arith.constant 0.000000e+00 : f32
    %13 = vector.broadcast %cst_11 : f32 to vector<8x128xf32>
    %14 = arith.maximumf %12, %13 : vector<8x128xf32>
    %c0_12 = arith.constant 0 : index
    %c0_13 = arith.constant 0 : index
    %15 = vector.load %arg6[%c0_12, %c0_13] : memref<8x128xf32, #tpu.memory_space<vmem>>, vector<8x128xf32>
    tpu.vector_store %arg6[%c0_12, %c0_13], %14 {strides = array<i32>} : memref<8x128xf32, #tpu.memory_space<vmem>>, vector<8x128xf32>,
    return
  }
  func.func @transform_0(%arg0: i32) -> (i32, i32) {
    %c0_i32 = arith.constant 0 : i32
    %c0_i32_0 = arith.constant 0 : i32
    return %arg0, %c0_i32 : i32, i32
  }
  func.func @transform_1(%arg0: i32) -> (i32, i32) {
    %c0_i32 = arith.constant 0 : i32
    %c0_i32_0 = arith.constant 0 : i32
    %c0_i32_1 = arith.constant 0 : i32
    return %c0_i32, %c0_i32_0 : i32, i32
  }
  func.func @transform_2(%arg0: i32) -> (i32, i32) {
    %c0_i32 = arith.constant 0 : i32
    %c0_i32_0 = arith.constant 0 : i32
    %c0_i32_1 = arith.constant 0 : i32
    return %c0_i32, %c0_i32_0 : i32, i32
  }
  func.func @transform_3(%arg0: i32) -> (i32, i32) {
    %c0_i32 = arith.constant 0 : i32
    %c0_i32_0 = arith.constant 0 : i32
    %c0_i32_1 = arith.constant 0 : i32
    return %c0_i32, %c0_i32_0 : i32, i32
  }
  func.func @transform_4(%arg0: i32) -> (i32, i32) {
    %c0_i32 = arith.constant 0 : i32
    %c0_i32_0 = arith.constant 0 : i32
    %c0_i32_1 = arith.constant 0 : i32
    return %c0_i32, %c0_i32_0 : i32, i32
  }
  func.func @transform_5(%arg0: i32) -> (i32, i32) {
    %c0_i32 = arith.constant 0 : i32
    %c0_i32_0 = arith.constant 0 : i32
    return %arg0, %c0_i32 : i32, i32
  }
}

</mosaic_0001>

<llo_original>
// kernel: tpu_custom_call.1
$region0: #{tpu_custom_call.1}
  #allocation0 [shape = 'u32[]', space=smem, size = 0x4, offset = 0x4, fixed_abs, tag = 'smem constant byte address 0x4 - core index']
  #allocation1 [shape = 'u32[144,128]{1,0:T(1,128)}', space=vmem, size = 0x12000, scoped, tag = 'internal scratch']
  %s0 = inlined_call_operand.hbm [shape: f32[8,15], index: 0, kind: input, shape index: {}]
  %s1 = inlined_call_operand.hbm [shape: f32[15,200], index: 1, kind: input, shape index: {}]
  %s2 = inlined_call_operand.vmem [shape: f32[1,200], index: 2, kind: input, shape index: {}]
  %s3 = inlined_call_operand.hbm [shape: f32[200,128], index: 3, kind: input, shape index: {}]
  %s4 = inlined_call_operand.vmem [shape: f32[1,128], index: 4, kind: input, shape index: {}]
  %s5 = inlined_call_operand.hbm [shape: f32[8,128], index: 5, kind: output, shape index: {}]
  %s6 = sld [smem:[#allocation0]]
  $region42: #{tpu_custom_call.1} parent=0
    _
  %s8 = ssub.s32 1, %s6
  %s9 = scalar_select 0, %s8, %s6
  $region1: #{tpu_custom_call.1} parent=0
    #allocation2 [shape = 'u8[4096]{0}', space=vmem, size = 0x1000, scoped, tag = 'input window, operand 0, single buffered']
    #allocation3 [shape = 's32[1]{0}', space=sflag, size = 0x4, scoped, tag = 'scoped memory for tpu_custom_call.1']
    #allocation4 [shape = 's32[1]{0}', space=sflag, size = 0x4, scoped, tag = 'scoped memory for tpu_custom_call.1']
    #allocation5 [shape = 'u8[16384]{0}', space=vmem, size = 0x4000, scoped, tag = 'input window, operand 1, single buffered']
    #allocation6 [shape = 's32[1]{0}', space=sflag, size = 0x4, scoped, tag = 'scoped memory for tpu_custom_call.1']
    #allocation7 [shape = 'u8[102400]{0}', space=vmem, size = 0x19000, scoped, tag = 'input window, operand 3, single buffered']
    #allocation8 [shape = 'u8[4096]{0}', space=vmem, size = 0x1000, scoped, tag = 'output window, operand 0, single buffered']
    %10 = vsyncpa [#allocation3], 0
    %11 = vsyncpa [#allocation6], 0
    %12 = vsyncpa [#allocation4], 0
    // Predicated region
    $region2: #{tpu_custom_call.1} parent=1 // pred_check
      _
    $region3: #{tpu_custom_call.1} parent=1 // pred_check_branch
      %14 = sbr.rel (0) target = $region5
    $region4: #{tpu_custom_call.1} parent=1 // pred_region
      %s16 = ssub.s32 128, 128
      %17 = vsyncadd [#allocation3], %s16
      %s19 = sshll.u32 [#allocation2], 4
      %s20 = int_to_ptr.vmem [resolvable:$true] %s19
      %22 = dma.hbm_to_vmem [thread:$0]  %s0, 128, %s20, [#allocation3]
    $region5: #{tpu_custom_call.1} parent=1 // pred_fallthru
      _
    // Predicated region
    $region6: #{tpu_custom_call.1} parent=1 // pred_check
      _
    $region7: #{tpu_custom_call.1} parent=1 // pred_check_branch
      %24 = sbr.rel (0) target = $region9
    $region8: #{tpu_custom_call.1} parent=1 // pred_region
      %s26 = ssub.s32 512, 512
      %27 = vsyncadd [#allocation6], %s26
      %s28 = sshll.u32 [#allocation5], 4
      %s29 = int_to_ptr.vmem [resolvable:$true] %s28
      %34 = dma.hbm_to_vmem [thread:$0]  %s1, 512, %s29, [#allocation6], 256, 256, 16
    $region9: #{tpu_custom_call.1} parent=1 // pred_fallthru
      _
    // Predicated region
    $region10: #{tpu_custom_call.1} parent=1 // pred_check
      _
    $region11: #{tpu_custom_call.1} parent=1 // pred_check_branch
      %36 = sbr.rel (0) target = $region13
    $region12: #{tpu_custom_call.1} parent=1 // pred_region
      _
    $region13: #{tpu_custom_call.1} parent=1 // pred_fallthru
      _
    // Predicated region
    $region14: #{tpu_custom_call.1} parent=1 // pred_check
      _
    $region15: #{tpu_custom_call.1} parent=1 // pred_check_branch
      %38 = sbr.rel (0) target = $region17
    $region16: #{tpu_custom_call.1} parent=1 // pred_region
      %s40 = ssub.s32 3200, 3200
      %41 = vsyncadd [#allocation6], %s40
      %s42 = sshll.u32 [#allocation7], 4
      %s43 = int_to_ptr.vmem [resolvable:$true] %s42
      %48 = dma.hbm_to_vmem [thread:$0]  %s3, 3200, %s43, [#allocation6], 128, 128, 8
    $region17: #{tpu_custom_call.1} parent=1 // pred_fallthru
      _
    // Predicated region
    $region18: #{tpu_custom_call.1} parent=1 // pred_check
      _
    $region19: #{tpu_custom_call.1} parent=1 // pred_check_branch
      %50 = sbr.rel (0) target = $region21
    $region20: #{tpu_custom_call.1} parent=1 // pred_region
      _
    $region21: #{tpu_custom_call.1} parent=1 // pred_fallthru
      _
    // Predicated region
    $region22: #{tpu_custom_call.1} parent=1 // pred_check
      _
    $region23: #{tpu_custom_call.1} parent=1 // pred_check_branch
      %52 = sbr.rel (0) target = $region25
    $region24: #{tpu_custom_call.1} parent=1 // pred_region
      %53 = dma.done [#allocation3], 128
    $region25: #{tpu_custom_call.1} parent=1 // pred_fallthru
      _
    // Predicated region
    $region26: #{tpu_custom_call.1} parent=1 // pred_check
      _
    $region27: #{tpu_custom_call.1} parent=1 // pred_check_branch
      %55 = sbr.rel (0) target = $region29
    $region28: #{tpu_custom_call.1} parent=1 // pred_region
      %56 = dma.done [#allocation6], 512
    $region29: #{tpu_custom_call.1} parent=1 // pred_fallthru
      _
    // Predicated region
    $region30: #{tpu_custom_call.1} parent=1 // pred_check
      _
    $region31: #{tpu_custom_call.1} parent=1 // pred_check_branch
      %58 = sbr.rel (0) target = $region33
    $region32: #{tpu_custom_call.1} parent=1 // pred_region
      %59 = dma.done [#allocation6], 3200
    $region33: #{tpu_custom_call.1} parent=1 // pred_fallthru
      _
    %v60 = vld [vmem:[#allocation2] sm:$0xff]
    %v61 = vld [vmem:[#allocation5] sm:$0xff]
    %v62 = vld [vmem:[#allocation5 + $0x8] sm:$0xff]
    %v63 = vld [vmem:[#allocation5 + $0x10] sm:$0x7f]
    %v64 = vld [vmem:[#allocation5 + $0x18] sm:$0x7f]
    %v65 = vld [vmem:[%s2] sm:$0x3]
    %v67 = vlaneseq
    %v68 = vshrl.u32 %v67, 7
    %v69 = vsub.s32 0, %v68
    %v70 = vrot.slane %v65, %v69
    %v71 = vlaneseq
    %v72 = vshrl.u32 %v71, 7
    %v73 = vsub.s32 1, %v72
    %v74 = vrot.slane %v65, %v73
    %vm77 = vcmask 121856
    %v79 = vsel %vm77, %v60, 0
    %vm81 = vcmask 1046528
    %v83 = vsel %vm81, %v63, 0
    %v86 = vsel %vm81, %v64, 0
    %88 = vmatprep.subr.mxu0 %v62
    %89 = vmatpush1.msra.mxu0 %v61
    %90 = vmatprep.subr.mxu0 %v86
    %91 = vmatpush1.msra.mxu0 %v83
    %92 = vmatprep.subr.mxu0 0.0
    %93 = vmatpush1.msra.mxu0 0.0
    %94 = vmatprep.subr.mxu0 0.0
    %95 = vmatpush1.msra.mxu0 0.0
    %96 = vmatprep.subr.mxu0 0.0
    %97 = vmatpush1.msra.mxu0 0.0
    %98 = vmatprep.subr.mxu0 0.0
    %99 = vmatpush1.msra.mxu0 0.0
    %100 = vmatprep.subr.mxu0 0.0
    %101 = vmatpush1.msra.mxu0 0.0
    %102 = vmatprep.subr.mxu0 0.0
    %103 = vmatpush1.msra.mxu0 0.0
    %104 = vmatprep.subr.mxu0 0.0
    %105 = vmatpush1.msra.mxu0 0.0
    %106 = vmatprep.subr.mxu0 0.0
    %107 = vmatpush1.msra.mxu0 0.0
    %108 = vmatprep.subr.mxu0 0.0
    %109 = vmatpush1.msra.mxu0 0.0
    %110 = vmatprep.subr.mxu0 0.0
    %111 = vmatpush1.msra.mxu0 0.0
    %112 = vmatprep.subr.mxu0 0.0
    %113 = vmatpush1.msra.mxu0 0.0
    %114 = vmatprep.subr.mxu0 0.0
    %115 = vmatpush1.msra.mxu0 0.0
    %116 = vmatprep.subr.mxu0 0.0
    %117 = vmatpush1.msra.mxu0 0.0
    %118 = vmatprep.subr.mxu0 0.0
    %119 = vmatpush1.msra.mxu0 0.0
    %120 = vmatprep.subr.mxu0 0.0
    %121 = vmatpush1.msra.mxu0 0.0
    %122 = vmatprep.subr.mxu0 0.0
    %123 = vmatpush1.msra.mxu0 0.0
    %124 = vmatprep.subr.mxu0 0.0
    %125 = vmatpush1.msra.mxu0 0.0
    %126 = vmatprep.subr.mxu0 0.0
    %127 = vmatpush1.msra.mxu0 0.0
    %128 = vmatprep.subr.mxu0 0.0
    %129 = vmatpush1.msra.mxu0 0.0
    %130 = vmatprep.subr.mxu0 0.0
    %131 = vmatpush1.msra.mxu0 0.0
    %132 = vmatprep.subr.mxu0 0.0
    %133 = vmatpush1.msra.mxu0 0.0
    %134 = vmatprep.subr.mxu0 0.0
    %135 = vmatpush1.msra.mxu0 0.0
    %136 = vmatprep.subr.mxu0 0.0
    %137 = vmatpush1.msra.mxu0 0.0
    %138 = vmatprep.subr.mxu0 0.0
    %139 = vmatpush1.msra.mxu0 0.0
    %140 = vmatprep.subr.mxu0 0.0
    %141 = vmatpush1.msra.mxu0 0.0
    %142 = vmatprep.subr.mxu0 0.0
    %143 = vmatpush1.msra.mxu0 0.0
    %144 = vmatprep.subr.mxu0 0.0
    %145 = vmatpush1.msra.mxu0 0.0
    %146 = vmatprep.subr.mxu0 0.0
    %147 = vmatpush1.msra.mxu0 0.0
    %148 = vmatprep.subr.mxu0 0.0
    %149 = vmatpush1.msra.mxu0 0.0
    %150 = vmatprep.subr.mxu0 0.0
    %151 = vmatpush1.msra.mxu0 0.0
    %152 = vmatprep.mubr.f32.mxu0 0.0
    %153 = vmatmul.mubr.f32.gmra.mrb[0].mxu0 %v79
    %v154 = vpop.f32.mrb[0].mxu0
    %v155 = vadd.f32 %v70, %v154
    %v156 = vpop.f32.mrb[0].mxu0
    %v157 = vadd.f32 %v74, %v156
    %158 = vdwg.mxu0
    %v159 = vmax.f32 %v155, 0.0
    %v160 = vmax.f32 %v157, 0.0
    %v161 = vld [vmem:[#allocation7] sm:$0xff]
    %v162 = vld [vmem:[#allocation7 + $0x8] sm:$0xff]
    %v163 = vld [vmem:[#allocation7 + $0x10] sm:$0xff]
    %v164 = vld [vmem:[#allocation7 + $0x18] sm:$0xff]
    %v165 = vld [vmem:[#allocation7 + $0x20] sm:$0xff]
    %v166 = vld [vmem:[#allocation7 + $0x28] sm:$0xff]
    %v167 = vld [vmem:[#allocation7 + $0x30] sm:$0xff]
    %v168 = vld [vmem:[#allocation7 + $0x38] sm:$0xff]
    %v169 = vld [vmem:[#allocation7 + $0x40] sm:$0xff]
    %v170 = vld [vmem:[#allocation7 + $0x48] sm:$0xff]
    %v171 = vld [vmem:[#allocation7 + $0x50] sm:$0xff]
    %v172 = vld [vmem:[#allocation7 + $0x58] sm:$0xff]
    %v173 = vld [vmem:[#allocation7 + $0x60] sm:$0xff]
    %v174 = vld [vmem:[#allocation7 + $0x68] sm:$0xff]
    %v175 = vld [vmem:[#allocation7 + $0x70] sm:$0xff]
    %v176 = vld [vmem:[#allocation7 + $0x78] sm:$0xff]
    %v177 = vld [vmem:[#allocation7 + $0x80] sm:$0xff]
    %v178 = vld [vmem:[#allocation7 + $0x88] sm:$0xff]
    %v179 = vld [vmem:[#allocation7 + $0x90] sm:$0xff]
    %v180 = vld [vmem:[#allocation7 + $0x98] sm:$0xff]
    %v181 = vld [vmem:[#allocation7 + $0xa0] sm:$0xff]
    %v182 = vld [vmem:[#allocation7 + $0xa8] sm:$0xff]
    %v183 = vld [vmem:[#allocation7 + $0xb0] sm:$0xff]
    %v184 = vld [vmem:[#allocation7 + $0xb8] sm:$0xff]
    %v185 = vld [vmem:[#allocation7 + $0xc0] sm:$0xff]
    %v186 = vld [vmem:[%s4] sm:$0x1]
    %v188 = vlaneseq
    %v189 = vshrl.u32 %v188, 7
    %v190 = vsub.s32 0, %v189
    %v191 = vrot.slane %v186, %v190
    %vm193 = vcmask 588800
    %v195 = vsel %vm193, %v160, 0
    %197 = vmatprep.subr.mxu0 0.0
    %198 = vmatpush1.msra.mxu0 %v161
    %199 = vmatprep.subr.mxu0 0.0
    %200 = vmatpush1.msra.mxu0 %v162
    %201 = vmatprep.subr.mxu0 0.0
    %202 = vmatpush1.msra.mxu0 %v163
    %203 = vmatprep.subr.mxu0 0.0
    %204 = vmatpush1.msra.mxu0 %v164
    %205 = vmatprep.subr.mxu0 0.0
    %206 = vmatpush1.msra.mxu0 %v165
    %207 = vmatprep.subr.mxu0 0.0
    %208 = vmatpush1.msra.mxu0 %v166
    %209 = vmatprep.subr.mxu0 0.0
    %210 = vmatpush1.msra.mxu0 %v167
    %211 = vmatprep.subr.mxu0 0.0
    %212 = vmatpush1.msra.mxu0 %v168
    %213 = vmatprep.subr.mxu0 0.0
    %214 = vmatpush1.msra.mxu0 %v169
    %215 = vmatprep.subr.mxu0 0.0
    %216 = vmatpush1.msra.mxu0 %v170
    %217 = vmatprep.subr.mxu0 0.0
    %218 = vmatpush1.msra.mxu0 %v171
    %219 = vmatprep.subr.mxu0 0.0
    %220 = vmatpush1.msra.mxu0 %v172
    %221 = vmatprep.subr.mxu0 0.0
    %222 = vmatpush1.msra.mxu0 %v173
    %223 = vmatprep.subr.mxu0 0.0
    %224 = vmatpush1.msra.mxu0 %v174
    %225 = vmatprep.subr.mxu0 0.0
    %226 = vmatpush1.msra.mxu0 %v175
    %227 = vmatprep.subr.mxu0 0.0
    %228 = vmatpush1.msra.mxu0 %v176
    %229 = vmatprep.subr.mxu0 0.0
    %230 = vmatpush1.msra.mxu0 %v177
    %231 = vmatprep.subr.mxu0 0.0
    %232 = vmatpush1.msra.mxu0 %v178
    %233 = vmatprep.subr.mxu0 0.0
    %234 = vmatpush1.msra.mxu0 %v179
    %235 = vmatprep.subr.mxu0 0.0
    %236 = vmatpush1.msra.mxu0 %v180
    %237 = vmatprep.subr.mxu0 0.0
    %238 = vmatpush1.msra.mxu0 %v181
    %239 = vmatprep.subr.mxu0 0.0
    %240 = vmatpush1.msra.mxu0 %v182
    %241 = vmatprep.subr.mxu0 0.0
    %242 = vmatpush1.msra.mxu0 %v183
    %243 = vmatprep.subr.mxu0 0.0
    %244 = vmatpush1.msra.mxu0 %v184
    %245 = vmatprep.subr.mxu0 0.0
    %246 = vmatpush1.msra.mxu0 %v185
    %247 = vmatprep.subr.mxu0 0.0
    %248 = vmatpush1.msra.mxu0 0.0
    %249 = vmatprep.subr.mxu0 0.0
    %250 = vmatpush1.msra.mxu0 0.0
    %251 = vmatprep.subr.mxu0 0.0
    %252 = vmatpush1.msra.mxu0 0.0
    %253 = vmatprep.subr.mxu0 0.0
    %254 = vmatpush1.msra.mxu0 0.0
    %255 = vmatprep.subr.mxu0 0.0
    %256 = vmatpush1.msra.mxu0 0.0
    %257 = vmatprep.subr.mxu0 0.0
    %258 = vmatpush1.msra.mxu0 0.0
    %259 = vmatprep.subr.mxu0 0.0
    %260 = vmatpush1.msra.mxu0 0.0
    %261 = vmatprep.mubr.f32.mxu0 %v195
    %262 = vmatmul.mubr.f32.gmra.mrb[0].mxu0 %v159
    %v263 = vpop.f32.mrb[0].mxu0
    %v264 = vadd.f32 %v191, %v263
    %v265 = vpop.f32.mrb[0].mxu0
    %266 = vdwg.mxu0
    %v267 = vmax.f32 %v264, 0.0
    %268 = vst [vmem:[#allocation8] sm:$0xff] %v267
    // Predicated region
    $region34: #{tpu_custom_call.1} parent=1 // pred_check
      _
    $region35: #{tpu_custom_call.1} parent=1 // pred_check_branch
      %270 = sbr.rel (0) target = $region37
    $region36: #{tpu_custom_call.1} parent=1 // pred_region
      %s272 = ssub.s32 128, 128
      %273 = vsyncadd [#allocation4], %s272
      %s275 = sshll.u32 [#allocation8], 4
      %s276 = int_to_ptr.vmem [resolvable:$true] %s275
      %278 = dma.vmem_to_hbm [thread:$0]  %s276, 128, %s5, [#allocation4]
    $region37: #{tpu_custom_call.1} parent=1 // pred_fallthru
      _
    // Predicated region
    $region38: #{tpu_custom_call.1} parent=1 // pred_check
      _
    $region39: #{tpu_custom_call.1} parent=1 // pred_check_branch
      %280 = sbr.rel (0) target = $region41
    $region40: #{tpu_custom_call.1} parent=1 // pred_region
      %281 = dma.done [#allocation4], 128
    $region41: #{tpu_custom_call.1} parent=1 // pred_fallthru
      _
    %282 = vsyncpa [#allocation3], 1
    %283 = vsyncpa [#allocation6], 1
    %284 = vsyncpa [#allocation4], 1

</llo_original>
